<compile_context>
chip_gen: v5e
topology: v5e:2x2
jax: 0.10.0
libtpu: 0.0.40
codegen_flags: <defaults>
</compile_context>

<pallas_src>
import functools

import jax
import jax.numpy as jnp
from jax import lax
from jax.experimental import pallas as pl
from jax.experimental.pallas import tpu as pltpu

LANES = 128
MAX_TILE_ROWS = 4096   # 4096x128 f32 = 2 MiB per input block; sweep 2048-4096
ACC_ROWS = 64          # accumulator sublane rows (8 vregs) -> independent add chains


def _multi_tensorcore_chip() -> bool:
    """True on chips where a 'parallel' grid axis shards across TensorCores."""
    try:
        kind = jax.devices()[0].device_kind.lower()
    except Exception:  # pragma: no cover - defensive
        return False
    return ("v4" in kind) or ("v7" in kind) or ("7x" in kind)


def _wmse_kernel(t_ref, p_ref, out_ref, *, tile_rows, acc_rows,
                 steps_per_split, valid_rows, need_mask):
    c = pl.program_id(0)   # split index ("parallel")
    i = pl.program_id(1)   # tile-walk / reduction index ("arbitrary")
    start_row = (c * steps_per_split + i) * tile_rows

    @pl.when(i == 0)
    def _():
        out_ref[...] = jnp.zeros_like(out_ref)

    def accumulate(mask_rows):
        t = t_ref[...].astype(jnp.float32)
        p = p_ref[...].astype(jnp.float32)
        # Faithful PyTorch binarize: target[target > 0] = 1 (values <= 0 kept).
        tb = jnp.where(t > 0.0, jnp.float32(1.0), t)
        err = tb - p
        # sign-based 0.9/0.1 weighting collapses to one select (err==0 -> sq==0).
        w = (err * err) * jnp.where(err > 0.0, jnp.float32(0.9),
                                    jnp.float32(0.1))
        if mask_rows:
            # Zero rows past the end of the data (straddling last tile and/or
            # phantom steps of the 2-way split; their DMA is clamped in-bounds
            # by the index_map, so only their contribution must be dropped).
            row_ids = lax.broadcasted_iota(jnp.int32, w.shape, 0)
            w = jnp.where(start_row + row_ids < valid_rows, w,
                          jnp.float32(0.0))
        # In-register fold into a small resident accumulator (pure VALU; only
        # acc_rows x 128 f32 of VMEM read-modify-write per step).
        out_ref[0] += w.reshape(-1, acc_rows, LANES).sum(axis=0)

    if not need_mask:
        accumulate(mask_rows=False)
    else:
        fully_in = start_row + tile_rows <= valid_rows

        @pl.when(fully_in)
        def _():
            accumulate(mask_rows=False)

        @pl.when(jnp.logical_not(fully_in))
        def _():
            accumulate(mask_rows=True)


@functools.partial(jax.jit, static_argnames=("max_tile_rows",))
def weight_mse_loss(y_pred, y_true, *, max_tile_rows=MAX_TILE_ROWS):
    """Pallas equivalent of Weight_Mse_loss()(y_pred, y_true).

    y_pred: (N, C, H, W) float prediction (typically C == 1)
    y_true: (N, H, W)    ground truth (any numeric dtype, kept native)
    returns scalar float32 loss (a sum, as in weight_mse_coeff3).
    """
    # target = y_true.unsqueeze(1); broadcast against y_pred.
    target = y_true[:, None, ...]
    if target.shape != y_pred.shape:
        # TODO(synk): rare C > 1 fallback materializes the broadcast in HBM; a
        # channel grid axis whose target index_map ignores it would stream
        # y_true only once.
        shape = jnp.broadcast_shapes(target.shape, y_pred.shape)
        target = jnp.broadcast_to(target, shape)
        y_pred = jnp.broadcast_to(y_pred, shape)

    # Free reshapes, native dtypes (no f32 cast / pad in HBM).
    t_flat = target.reshape(-1)
    p_flat = y_pred.reshape(-1)

    n = t_flat.shape[0]
    rows = n // LANES
    n_main = rows * LANES
    tail = n - n_main

    # <128-element lane tail: tiny plain-JAX epilogue instead of a full-array pad.
    if tail:
        t_t = t_flat[n_main:].astype(jnp.float32)
        p_t = p_flat[n_main:].astype(jnp.float32)
        tb_t = jnp.where(t_t > 0.0, 1.0, t_t)
        err_t = tb_t - p_t
        tail_sum = jnp.sum(err_t * err_t * jnp.where(err_t > 0.0, 0.9, 0.1),
                           dtype=jnp.float32)
    else:
        tail_sum = jnp.float32(0.0)

    if rows == 0:
        return tail_sum

    t2 = t_flat[:n_main].reshape(rows, LANES)
    p2 = p_flat[:n_main].reshape(rows, LANES)

    # Block sublane dim: full row count for small inputs, else a large tile.
    tile_rows = rows if rows < max_tile_rows else max_tile_rows
    total_steps = (rows + tile_rows - 1) // tile_rows

    # 2-way split only where it shards across TensorCores and there is work.
    num_splits = 2 if (_multi_tensorcore_chip() and total_steps >= 2) else 1
    steps_per_split = (total_steps + num_splits - 1) // num_splits
    covered_rows = num_splits * steps_per_split * tile_rows
    need_mask = covered_rows != rows
    last_block = total_steps - 1

    # Accumulator rows: largest of {64, 8, tile_rows} that divides tile_rows.
    if tile_rows % ACC_ROWS == 0:
        acc_rows = ACC_ROWS
    elif tile_rows % 8 == 0:
        acc_rows = 8
    else:
        acc_rows = tile_rows

    def in_map(c, i):
        # Clamp so phantom steps never issue a fully out-of-bounds DMA; their
        # contribution is zeroed by the in-kernel (pl.when-gated) row mask.
        return (jnp.minimum(c * steps_per_split + i, last_block), 0)

    kernel = functools.partial(
        _wmse_kernel,
        tile_rows=tile_rows,
        acc_rows=acc_rows,
        steps_per_split=steps_per_split,
        valid_rows=rows,
        need_mask=need_mask,
    )

    partials = pl.pallas_call(
        kernel,
        out_shape=jax.ShapeDtypeStruct((num_splits, acc_rows, LANES),
                                       jnp.float32),
        grid_spec=pltpu.PrefetchScalarGridSpec(
            num_scalar_prefetch=0,
            grid=(num_splits, steps_per_split),
            in_specs=[
                pl.BlockSpec((tile_rows, LANES), in_map),
                pl.BlockSpec((tile_rows, LANES), in_map),
            ],
            out_specs=pl.BlockSpec((1, acc_rows, LANES),
                                   lambda c, i: (c, 0, 0)),
        ),
        compiler_params=pltpu.CompilerParams(
            dimension_semantics=("parallel", "arbitrary"),
        ),
    )(t2, p2)

    # Final (tiny) reduction of the per-split accumulators.
    return jnp.sum(partials, dtype=jnp.float32) + tail_sum


def _reference(y_pred, y_true):
    """Pure-JAX mirror of weight_mse_coeff3 (PyTorch semantics)."""
    t = y_true[:, None, ...].astype(jnp.float32)
    t = jnp.where(t > 0.0, 1.0, t)          # target[target > 0] = 1
    err = t - y_pred.astype(jnp.float32)
    sq = err * err
    s = jnp.sign(err)
    return jnp.sum((s + 1.0) / 2.0 * sq * 0.9 + (s - 1.0) / -2.0 * sq * 0.1)


if __name__ == "__main__":
    key = jax.random.PRNGKey(0)
    k1, k2, k3, k4, k5, k6 = jax.random.split(key, 6)

    # Lane-aligned case: (N, C, H, W) = (2, 1, 16, 16) -> 512 elems, 4 rows.
    y_pred = jax.nn.sigmoid(jax.random.normal(k1, (2, 1, 16, 16), jnp.float32))
    y_true = jax.random.randint(k2, (2, 16, 16), 0, 3).astype(jnp.int32)
    loss = jax.block_until_ready(weight_mse_loss(y_pred, y_true))
    ref = _reference(y_pred, y_true)
    assert jnp.allclose(loss, ref, rtol=1e-5, atol=1e-5), (loss, ref)

    # Ragged case (exercises the <128-element lane-tail JAX epilogue).
    y_pred2 = jax.nn.sigmoid(jax.random.normal(k3, (2, 1, 13, 21), jnp.float32))
    y_true2 = jax.random.randint(k4, (2, 13, 21), 0, 3).astype(jnp.int32)
    loss2 = jax.block_until_ready(weight_mse_loss(y_pred2, y_true2))
    ref2 = _reference(y_pred2, y_true2)
    assert jnp.allclose(loss2, ref2, rtol=1e-5, atol=1e-5), (loss2, ref2)

    # Multi-tile case with a partial last tile: forces the pl.when row-mask
    # path (and, on multi-TC chips, the 2-way split + phantom-step clamp) by
    # shrinking max_tile_rows.  n = 2*26*32 = 1664 -> 13 rows, tile_rows = 8.
    y_pred3 = jax.nn.sigmoid(jax.random.normal(k5, (2, 1, 26, 32), jnp.float32))
    y_true3 = jax.random.randint(k6, (2, 26, 32), 0, 3).astype(jnp.int32)
    loss3 = jax.block_until_ready(
        weight_mse_loss(y_pred3, y_true3, max_tile_rows=8))
    ref3 = _reference(y_pred3, y_true3)
    assert jnp.allclose(loss3, ref3, rtol=1e-5, atol=1e-5), (loss3, ref3)

    print("KERNEL_OK")
</pallas_src>

<mosaic_0001>
module attributes {stable_mosaic.version = 11 : i64} {
  func.func @_wmse_kernel(%arg0: i32, %arg1: i32, %arg2: memref<4x128xi32, #tpu.memory_space<vmem>>, %arg3: memref<4x128xf32, #tpu.memory_space<vmem>>, %arg4: memref<1x4x128xf32, #tpu.memory_space<vmem>>) attributes {dimension_semantics = [#tpu.dimension_semantics<parallel>, #tpu.dimension_semantics<arbitrary>], iteration_bounds = array<i64: 1, 1>, scalar_prefetch = 0 : i64, scratch_operands = 0 : i64, tpu.core_type = #tpu.core_type<tc>, window_params = [{transform_indices = @transform_0, window_bounds = array<i64: 4, 128>}, {transform_indices = @transform_1, window_bounds = array<i64: 4, 128>}, {transform_indices = @transform_2, window_bounds = array<i64: 1, 4, 128>}]} {
    %c0_i32 = arith.constant 0 : i32
    %0 = arith.cmpi eq, %arg1, %c0_i32 : i32
    %1 = arith.extui %0 : i1 to i32
    %c0_i32_0 = arith.constant 0 : i32
    %2 = arith.cmpi ne, %1, %c0_i32_0 : i32
    scf.if %2 {
      %cst_15 = arith.constant 0.000000e+00 : f32
      %26 = vector.broadcast %cst_15 : f32 to vector<1x4x128xf32>
      %c0_16 = arith.constant 0 : index
      %c0_17 = arith.constant 0 : index
      %c0_18 = arith.constant 0 : index
      %27 = vector.load %arg4[%c0_16, %c0_17, %c0_18] : memref<1x4x128xf32, #tpu.memory_space<vmem>>, vector<1x4x128xf32>
      tpu.vector_store %arg4[%c0_16, %c0_17, %c0_18], %26 {strides = array<i32>} : memref<1x4x128xf32, #tpu.memory_space<vmem>>, vector<1x4x128xf32>,
    } else {
    }
    %c0 = arith.constant 0 : index
    %c0_1 = arith.constant 0 : index
    %3 = vector.load %arg2[%c0, %c0_1] : memref<4x128xi32, #tpu.memory_space<vmem>>, vector<4x128xi32>
    %4 = arith.sitofp %3 : vector<4x128xi32> to vector<4x128xf32>
    %c0_2 = arith.constant 0 : index
    %c0_3 = arith.constant 0 : index
    %5 = vector.load %arg3[%c0_2, %c0_3] : memref<4x128xf32, #tpu.memory_space<vmem>>, vector<4x128xf32>
    %cst = arith.constant 0.000000e+00 : f32
    %6 = vector.broadcast %cst : f32 to vector<4x128xf32>
    %7 = arith.cmpf ogt, %4, %6 : vector<4x128xf32>
    %cst_4 = arith.constant 1.000000e+00 : f32
    %8 = vector.broadcast %cst_4 : f32 to vector<4x128xf32>
    %9 = arith.select %7, %8, %4 : vector<4x128xi1>, vector<4x128xf32>
    %10 = arith.subf %9, %5 : vector<4x128xf32>
    %11 = arith.mulf %10, %10 : vector<4x128xf32>
    %cst_5 = arith.constant 0.000000e+00 : f32
    %12 = vector.broadcast %cst_5 : f32 to vector<4x128xf32>
    %13 = arith.cmpf ogt, %10, %12 : vector<4x128xf32>
    %cst_6 = arith.constant 0.899999976 : f32
    %cst_7 = arith.constant 1.000000e-01 : f32
    %14 = vector.broadcast %cst_6 : f32 to vector<4x128xf32>
    %15 = vector.broadcast %cst_7 : f32 to vector<4x128xf32>
    %16 = arith.select %13, %14, %15 : vector<4x128xi1>, vector<4x128xf32>
    %17 = arith.mulf %11, %16 : vector<4x128xf32>
    %c0_8 = arith.constant 0 : index
    %c0_9 = arith.constant 0 : index
    %c0_10 = arith.constant 0 : index
    %18 = vector.load %arg4[%c0_8, %c0_9, %c0_10] : memref<1x4x128xf32, #tpu.memory_space<vmem>>, vector<1x4x128xf32>
    %19 = vector.shape_cast %18 : vector<1x4x128xf32> to vector<4x128xf32>
    %20 = vector.shape_cast %17 : vector<4x128xf32> to vector<1x4x128xf32>
    %cst_11 = arith.constant dense<0.000000e+00> : vector<4x128xf32>
    %21 = vector.multi_reduction <add>, %20, %cst_11 [0] : vector<1x4x128xf32> to vector<4x128xf32>
    %22 = arith.addf %19, %21 : vector<4x128xf32>
    %c0_12 = arith.constant 0 : index
    %c0_13 = arith.constant 0 : index
    %c0_14 = arith.constant 0 : index
    %23 = vector.load %arg4[%c0_12, %c0_13, %c0_14] : memref<1x4x128xf32, #tpu.memory_space<vmem>>, vector<1x4x128xf32>
    %24 = vector.shape_cast %23 : vector<1x4x128xf32> to vector<4x128xf32>
    %25 = vector.shape_cast %22 : vector<4x128xf32> to vector<1x4x128xf32>
    tpu.vector_store %arg4[%c0_12, %c0_13, %c0_14], %25 {strides = array<i32>} : memref<1x4x128xf32, #tpu.memory_space<vmem>>, vector<1x4x128xf32>,
    return
  }
  func.func @transform_0(%arg0: i32, %arg1: i32) -> (i32, i32) {
    %c1_i32 = arith.constant 1 : i32
    %0 = arith.muli %arg0, %c1_i32 : i32
    %1 = arith.addi %0, %arg1 : i32
    %c0_i32 = arith.constant 0 : i32
    %2 = arith.minsi %1, %c0_i32 : i32
    %c0_i32_0 = arith.constant 0 : i32
    %c0_i32_1 = arith.constant 0 : i32
    return %2, %c0_i32_0 : i32, i32
  }
  func.func @transform_1(%arg0: i32, %arg1: i32) -> (i32, i32) {
    %c1_i32 = arith.constant 1 : i32
    %0 = arith.muli %arg0, %c1_i32 : i32
    %1 = arith.addi %0, %arg1 : i32
    %c0_i32 = arith.constant 0 : i32
    %2 = arith.minsi %1, %c0_i32 : i32
    %c0_i32_0 = arith.constant 0 : i32
    %c0_i32_1 = arith.constant 0 : i32
    return %2, %c0_i32_0 : i32, i32
  }
  func.func @transform_2(%arg0: i32, %arg1: i32) -> (i32, i32, i32) {
    %c0_i32 = arith.constant 0 : i32
    %c0_i32_0 = arith.constant 0 : i32
    %c0_i32_1 = arith.constant 0 : i32
    return %arg0, %c0_i32, %c0_i32_0 : i32, i32, i32
  }
}

</mosaic_0001>

<llo_original>
// kernel: weight_mse_loss.1
$region0: #{weight_mse_loss.1}
  #allocation0 [shape = 'u32[]', space=smem, size = 0x4, offset = 0x4, fixed_abs, tag = 'smem constant byte address 0x4 - core index']
  #allocation1 [shape = 'u32[72,128]{1,0:T(1,128)}', space=vmem, size = 0x9000, scoped, tag = 'internal scratch']
  %s0 = inlined_call_operand.vmem [shape: s32[4,128], index: 0, kind: input, shape index: {}]
  %s1 = inlined_call_operand.vmem [shape: f32[4,128], index: 1, kind: input, shape index: {}]
  %s2 = inlined_call_operand.vmem [shape: f32[1,4,128], index: 2, kind: output, shape index: {}]
  %s3 = sld [smem:[#allocation0]]
  $region22: #{weight_mse_loss.1} parent=0
    _
  %s5 = ssub.s32 1, %s3
  %s6 = scalar_select 0, %s5, %s3
  // Predicated region
  $region2: #{weight_mse_loss.1} parent=0 // pred_check
    _
  $region3: #{weight_mse_loss.1} parent=0 // pred_check_branch
    %8 = sbr.rel (0) target = $region5
  $region4: #{weight_mse_loss.1} parent=0 // pred_region
    %s9 = sadd.s32 0, 0
    %p10 = scmp.lt.s32.totalorder %s9, 0
    %s11 = scalar_select %p10, %s9, 0
    %p12 = scmp.lt.s32.totalorder %s11, 0
    %s13 = scalar_select %p12, %s11, 0
    %s14 = smul.addr %s13, 4
    %s15 = scalar_lea.vmem %s0, %s14
    %s16 = sadd.s32 0, 0
    %p17 = scmp.lt.s32.totalorder %s16, 0
    %s18 = scalar_select %p17, %s16, 0
  $region5: #{weight_mse_loss.1} parent=0 // pred_fallthru
    _
  // Predicated region
  $region6: #{weight_mse_loss.1} parent=0 // pred_check
    _
  $region7: #{weight_mse_loss.1} parent=0 // pred_check_branch
    %20 = sbr.rel (0) target = $region9
  $region8: #{weight_mse_loss.1} parent=0 // pred_region
    %s21 = sadd.s32 0, 0
    %p22 = scmp.lt.s32.totalorder %s21, 0
    %s23 = scalar_select %p22, %s21, 0
    %p24 = scmp.lt.s32.totalorder %s23, 0
    %s25 = scalar_select %p24, %s23, 0
    %s26 = smul.addr %s25, 4
    %s27 = scalar_lea.vmem %s1, %s26
    %s28 = sadd.s32 0, 0
    %p29 = scmp.lt.s32.totalorder %s28, 0
    %s30 = scalar_select %p29, %s28, 0
  $region9: #{weight_mse_loss.1} parent=0 // pred_fallthru
    _
  %s31 = sadd.s32 0, 0
  %p32 = scmp.lt.s32.totalorder %s31, 0
  %s33 = scalar_select %p32, %s31, 0
  %p34 = scmp.lt.s32.totalorder %s33, 0
  %s35 = scalar_select %p34, %s33, 0
  %s36 = smul.addr %s35, 4
  %s37 = scalar_lea.vmem %s0, %s36
  %s38 = sadd.s32 0, 0
  %p39 = scmp.lt.s32.totalorder %s38, 0
  %s40 = scalar_select %p39, %s38, 0
  %p41 = scmp.lt.s32.totalorder %s40, 0
  %s42 = scalar_select %p41, %s40, 0
  %s43 = smul.addr %s42, 4
  %s44 = scalar_lea.vmem %s1, %s43
  %s45 = sadd.s32 0, 0
  %p46 = scmp.lt.s32.totalorder %s45, 0
  %s47 = scalar_select %p46, %s45, 0
  %p48 = scmp.lt.s32.totalorder %s47, 0
  %s49 = scalar_select %p48, %s47, 0
  %s50 = smul.addr %s49, 4
  %s51 = scalar_lea.vmem %s0, %s50
  %s52 = sadd.s32 0, 0
  %p53 = scmp.lt.s32.totalorder %s52, 0
  %s54 = scalar_select %p53, %s52, 0
  %s55 = sadd.s32 0, 0
  %p56 = scmp.lt.s32.totalorder %s55, 0
  %s57 = scalar_select %p56, %s55, 0
  %p58 = scmp.lt.s32.totalorder %s57, 0
  %s59 = scalar_select %p58, %s57, 0
  %s60 = smul.addr %s59, 4
  %s61 = scalar_lea.vmem %s1, %s60
  %s62 = sadd.s32 0, 0
  %p63 = scmp.lt.s32.totalorder %s62, 0
  %s64 = scalar_select %p63, %s62, 0
  %p65 = scmp.eq.s32.totalorder 0, 0
  // Predicated region
  $region10: #{weight_mse_loss.1} parent=0 // pred_check
    %p66 = pneg %p65
  $region11: #{weight_mse_loss.1} parent=0 // pred_check_branch
    %68 = sbr.rel (%p66) target = $region13
  $region12: #{weight_mse_loss.1} parent=0 // pred_region
    %69 = vst [vmem:[%s2] sm:$0xf] 0.0
  $region13: #{weight_mse_loss.1} parent=0 // pred_fallthru
    _
  %v70 = vld [vmem:[%s51] sm:$0xf]
  %v71 = vcvt.s32.f32 %v70
  %v72 = vld [vmem:[%s61] sm:$0xf]
  %vm73 = vcmp.gt.f32.partialorder %v71, 0.0
  %v74 = vsel %vm73, 1.0, %v71
  %v75 = vsub.f32 %v74, %v72
  %v76 = vmul.f32 %v75, %v75
  %vm77 = vcmp.gt.f32.partialorder %v75, 0.0
  %v78 = vsel %vm77, 0.9, 0.1
  %v79 = vmul.f32 %v76, %v78
  %v80 = vld [vmem:[%s2] sm:$0xf]
  %v81 = vadd.f32 %v79, 0.0
  %v82 = vadd.f32 %v80, %v81
  %83 = vst [vmem:[%s2] sm:$0xf] %v82
  // Predicated region
  $region14: #{weight_mse_loss.1} parent=0 // pred_check
    _
  $region15: #{weight_mse_loss.1} parent=0 // pred_check_branch
    %85 = sbr.rel (0) target = $region17
  $region16: #{weight_mse_loss.1} parent=0 // pred_region
    _
  $region17: #{weight_mse_loss.1} parent=0 // pred_fallthru
    _
  // Predicated region
  $region18: #{weight_mse_loss.1} parent=0 // pred_check
    _
  $region19: #{weight_mse_loss.1} parent=0 // pred_check_branch
    %87 = sbr.rel (0) target = $region21
  $region20: #{weight_mse_loss.1} parent=0 // pred_region
    _
  $region21: #{weight_mse_loss.1} parent=0 // pred_fallthru
    _

</llo_original>
